<compile_context>
chip_gen: v6e
topology: v6e:2x2x1
jax: 0.10.0
libtpu: 0.0.40
codegen_flags: <defaults>
</compile_context>

<pallas_src>
import functools

import jax
import jax.numpy as jnp
from jax.experimental import pallas as pl
from jax.experimental.pallas import tpu as pltpu


def _round_up(x, m):
    return ((x + m - 1) // m) * m


def chatbot_mlp_kernel(x_ref, w1_ref, b1_ref, w2_ref, b2_ref, w3_ref, b3_ref,
                       o_ref):
    # Hoist bias loads once per body (no per-iteration re-broadcast).
    b1 = b1_ref[...]
    b2 = b2_ref[...]
    b3 = b3_ref[...]

    # Layer 1: Linear(input_size, 64) + ReLU   (bf16 MXU, f32 accumulate)
    h1 = jnp.dot(x_ref[...], w1_ref[...], preferred_element_type=jnp.float32)
    h1 = jnp.maximum(h1 + b1, 0.0)                    # f32 elementwise

    # Layer 2: Linear(64, 64) + ReLU
    h2 = jnp.dot(h1.astype(w2_ref.dtype), w2_ref[...],
                 preferred_element_type=jnp.float32)
    h2 = jnp.maximum(h2 + b2, 0.0)

    # Layer 3: Dropout (identity in eval) -> Linear(64, C_pad) + ReLU
    h3 = jnp.dot(h2.astype(w3_ref.dtype), w3_ref[...],
                 preferred_element_type=jnp.float32)
    h3 = jnp.maximum(h3 + b3, 0.0)

    # Lane-dense (TB, 128*k) store — unmasked vst.
    o_ref[...] = h3.astype(o_ref.dtype)


@functools.partial(jax.jit, static_argnames=("tb", "use_bf16"))
def chatbot_net_forward(x, params, *, tb=1024, use_bf16=True):
    """x: [B, input_size] f32.  params: transposed weights ([in, out]) + biases."""
    w1, b1 = params["w1"], params["b1"]   # [in, 64], [1, 64]
    w2, b2 = params["w2"], params["b2"]   # [64, 64], [1, 64]
    w3, b3 = params["w3"], params["b3"]   # [64, C],  [1, C]

    B, in_size = x.shape
    C = w3.shape[1]
    H = w1.shape[1]

    # --- lane-dense output: pad class dim to a multiple of 128 --------------
    c_pad = _round_up(max(C, 128), 128)
    w3p = jnp.pad(w3, ((0, 0), (0, c_pad - C)))
    b3p = jnp.pad(b3, ((0, 0), (0, c_pad - C)))

    # --- batch tiling: pad B to a multiple of the tile -----------------------
    tb_actual = min(tb, _round_up(B, 8))
    b_pad = _round_up(B, tb_actual)
    xp = jnp.pad(x, ((0, b_pad - B), (0, 0)))

    # --- bf16 streaming of x / weights (f32 accumulate, f32 biases) ---------
    cdt = jnp.bfloat16 if use_bf16 else jnp.float32
    xp = xp.astype(cdt)
    w1c, w2c, w3c = w1.astype(cdt), w2.astype(cdt), w3p.astype(cdt)
    b1f, b2f, b3f = (b1.astype(jnp.float32), b2.astype(jnp.float32),
                     b3p.astype(jnp.float32))

    grid = (pl.cdiv(b_pad, tb_actual),)

    const_spec = lambda shape: pl.BlockSpec(shape, lambda i: (0,) * len(shape))

    weight_bytes = sum(int(a.size) * a.dtype.itemsize
                       for a in (w1c, b1f, w2c, b2f, w3c, b3f))
    cost = pl.CostEstimate(
        flops=2 * b_pad * (in_size * H + H * H + H * c_pad),
        transcendentals=0,
        bytes_accessed=int(xp.size) * xp.dtype.itemsize
        + b_pad * c_pad * 4 + weight_bytes,
    )

    out = pl.pallas_call(
        chatbot_mlp_kernel,
        out_shape=jax.ShapeDtypeStruct((b_pad, c_pad), jnp.float32),
        grid=grid,
        in_specs=[
            pl.BlockSpec((tb_actual, in_size), lambda i: (i, 0)),  # x: streamed
            const_spec(w1c.shape), const_spec(b1f.shape),          # resident
            const_spec(w2c.shape), const_spec(b2f.shape),
            const_spec(w3c.shape), const_spec(b3f.shape),
        ],
        out_specs=pl.BlockSpec((tb_actual, c_pad), lambda i: (i, 0)),
        compiler_params=pltpu.CompilerParams(
            dimension_semantics=("parallel",)),
        cost_estimate=cost,
    )(xp, w1c, b1f, w2c, b2f, w3c, b3f)

    return out[:B, :C]


def init_params(key, input_size, num_classes):
    """Deterministic synthetic parameters (PyTorch Linear shapes, transposed)."""
    k1, k2, k3, k4, k5, k6 = jax.random.split(key, 6)
    s1 = 1.0 / jnp.sqrt(input_size)
    s2 = 1.0 / jnp.sqrt(64.0)
    return {
        # stored as [in_features, out_features]  (x @ W + b == PyTorch x @ W.T + b)
        "w1": jax.random.uniform(k1, (input_size, 64), jnp.float32, -s1, s1),
        "b1": jax.random.uniform(k2, (1, 64), jnp.float32, -s1, s1),
        "w2": jax.random.uniform(k3, (64, 64), jnp.float32, -s2, s2),
        "b2": jax.random.uniform(k4, (1, 64), jnp.float32, -s2, s2),
        "w3": jax.random.uniform(k5, (64, num_classes), jnp.float32, -s2, s2),
        "b3": jax.random.uniform(k6, (1, num_classes), jnp.float32, -s2, s2),
    }


def reference_forward(x, p, use_bf16=True):
    """Same math as the kernel (bf16 MXU inputs, f32 accumulate/elementwise)."""
    dt = jnp.bfloat16 if use_bf16 else jnp.float32
    h1 = jnp.dot(x.astype(dt), p["w1"].astype(dt),
                 preferred_element_type=jnp.float32)
    h1 = jnp.maximum(h1 + p["b1"], 0.0)
    h2 = jnp.dot(h1.astype(dt), p["w2"].astype(dt),
                 preferred_element_type=jnp.float32)
    h2 = jnp.maximum(h2 + p["b2"], 0.0)
    h3 = jnp.dot(h2.astype(dt), p["w3"].astype(dt),
                 preferred_element_type=jnp.float32)
    return jnp.maximum(h3 + p["b3"], 0.0)


if __name__ == "__main__":
    input_size = 32   # bag-of-words vocabulary size
    num_classes = 8   # number of intents

    key = jax.random.PRNGKey(0)
    kx, kp, kx2 = jax.random.split(key, 3)
    params = init_params(kp, input_size, num_classes)

    # Small sanity case: single tile, grid=(1,).
    batch = 8
    x = jax.random.normal(kx, (batch, input_size), jnp.float32)
    out = jax.block_until_ready(chatbot_net_forward(x, params))
    ref = reference_forward(x, params)
    assert out.shape == (batch, num_classes)
    assert jnp.allclose(out, ref, atol=1e-4, rtol=1e-4), "mismatch (batch=8)"

    # Multi-tile case: exercises the batch grid, residency of weights and the
    # padded (non-multiple-of-tile) trailing rows.
    batch2 = 200
    x2 = jax.random.normal(kx2, (batch2, input_size), jnp.float32)
    out2 = jax.block_until_ready(chatbot_net_forward(x2, params, tb=64))
    ref2 = reference_forward(x2, params)
    assert out2.shape == (batch2, num_classes)
    assert jnp.allclose(out2, ref2, atol=1e-4, rtol=1e-4), "mismatch (batch=200)"

    print("KERNEL_OK")
</pallas_src>

<mosaic_0001>
module attributes {stable_mosaic.version = 11 : i64} {
  func.func @chatbot_mlp_kernel(%arg0: i32, %arg1: memref<8x32xbf16, #tpu.memory_space<vmem>>, %arg2: memref<32x64xbf16, #tpu.memory_space<vmem>>, %arg3: memref<1x64xf32, #tpu.memory_space<vmem>>, %arg4: memref<64x64xbf16, #tpu.memory_space<vmem>>, %arg5: memref<1x64xf32, #tpu.memory_space<vmem>>, %arg6: memref<64x128xbf16, #tpu.memory_space<vmem>>, %arg7: memref<1x128xf32, #tpu.memory_space<vmem>>, %arg8: memref<8x128xf32, #tpu.memory_space<vmem>>) attributes {dimension_semantics = [#tpu.dimension_semantics<parallel>], iteration_bounds = array<i64: 1>, scalar_prefetch = 0 : i64, scratch_operands = 0 : i64, tpu.core_type = #tpu.core_type<tc>, window_params = [{transform_indices = @transform_0, window_bounds = array<i64: 8, 32>}, {pipeline_mode = #tpu.pipeline_mode<synchronous>, transform_indices = @transform_1, window_bounds = array<i64: 32, 64>}, {pipeline_mode = #tpu.pipeline_mode<synchronous>, transform_indices = @transform_2, window_bounds = array<i64: 1, 64>}, {pipeline_mode = #tpu.pipeline_mode<synchronous>, transform_indices = @transform_3, window_bounds = array<i64: 64, 64>}, {pipeline_mode = #tpu.pipeline_mode<synchronous>, transform_indices = @transform_4, window_bounds = array<i64: 1, 64>}, {pipeline_mode = #tpu.pipeline_mode<synchronous>, transform_indices = @transform_5, window_bounds = array<i64: 64, 128>}, {pipeline_mode = #tpu.pipeline_mode<synchronous>, transform_indices = @transform_6, window_bounds = array<i64: 1, 128>}, {transform_indices = @transform_7, window_bounds = array<i64: 8, 128>}]} {
    %c0 = arith.constant 0 : index
    %c0_0 = arith.constant 0 : index
    %0 = vector.load %arg3[%c0, %c0_0] : memref<1x64xf32, #tpu.memory_space<vmem>>, vector<1x64xf32>
    %c0_1 = arith.constant 0 : index
    %c0_2 = arith.constant 0 : index
    %1 = vector.load %arg5[%c0_1, %c0_2] : memref<1x64xf32, #tpu.memory_space<vmem>>, vector<1x64xf32>
    %c0_3 = arith.constant 0 : index
    %c0_4 = arith.constant 0 : index
    %2 = vector.load %arg7[%c0_3, %c0_4] : memref<1x128xf32, #tpu.memory_space<vmem>>, vector<1x128xf32>
    %c0_5 = arith.constant 0 : index
    %c0_6 = arith.constant 0 : index
    %3 = vector.load %arg1[%c0_5, %c0_6] : memref<8x32xbf16, #tpu.memory_space<vmem>>, vector<8x32xbf16>
    %c0_7 = arith.constant 0 : index
    %c0_8 = arith.constant 0 : index
    %4 = vector.load %arg2[%c0_7, %c0_8] : memref<32x64xbf16, #tpu.memory_space<vmem>>, vector<32x64xbf16>
    %cst = arith.constant dense<0.000000e+00> : vector<8x64xf32>
    %5 = tpu.matmul %3, %4, %cst {dimension_numbers = #tpu.dot_dimension_numbers<[1], [0], [0], [1], [0, 0, 1, 1], [], []>} : vector<8x32xbf16>, vector<32x64xbf16>, vector<8x64xf32> -> vector<8x64xf32>
    %6 = vector.broadcast %0 : vector<1x64xf32> to vector<8x64xf32>
    %7 = arith.addf %5, %6 : vector<8x64xf32>
    %cst_9 = arith.constant 0.000000e+00 : f32
    %8 = vector.broadcast %cst_9 : f32 to vector<8x64xf32>
    %9 = arith.maximumf %7, %8 : vector<8x64xf32>
    %10 = arith.truncf %9 : vector<8x64xf32> to vector<8x64xbf16>
    %c0_10 = arith.constant 0 : index
    %c0_11 = arith.constant 0 : index
    %11 = vector.load %arg4[%c0_10, %c0_11] : memref<64x64xbf16, #tpu.memory_space<vmem>>, vector<64x64xbf16>
    %cst_12 = arith.constant dense<0.000000e+00> : vector<8x64xf32>
    %12 = tpu.matmul %10, %11, %cst_12 {dimension_numbers = #tpu.dot_dimension_numbers<[1], [0], [0], [1], [0, 0, 1, 1], [], []>} : vector<8x64xbf16>, vector<64x64xbf16>, vector<8x64xf32> -> vector<8x64xf32>
    %13 = vector.broadcast %1 : vector<1x64xf32> to vector<8x64xf32>
    %14 = arith.addf %12, %13 : vector<8x64xf32>
    %cst_13 = arith.constant 0.000000e+00 : f32
    %15 = vector.broadcast %cst_13 : f32 to vector<8x64xf32>
    %16 = arith.maximumf %14, %15 : vector<8x64xf32>
    %17 = arith.truncf %16 : vector<8x64xf32> to vector<8x64xbf16>
    %c0_14 = arith.constant 0 : index
    %c0_15 = arith.constant 0 : index
    %18 = vector.load %arg6[%c0_14, %c0_15] : memref<64x128xbf16, #tpu.memory_space<vmem>>, vector<64x128xbf16>
    %cst_16 = arith.constant dense<0.000000e+00> : vector<8x128xf32>
    %19 = tpu.matmul %17, %18, %cst_16 {dimension_numbers = #tpu.dot_dimension_numbers<[1], [0], [0], [1], [0, 0, 1, 1], [], []>} : vector<8x64xbf16>, vector<64x128xbf16>, vector<8x128xf32> -> vector<8x128xf32>
    %20 = vector.broadcast %2 : vector<1x128xf32> to vector<8x128xf32>
    %21 = arith.addf %19, %20 : vector<8x128xf32>
    %cst_17 = arith.constant 0.000000e+00 : f32
    %22 = vector.broadcast %cst_17 : f32 to vector<8x128xf32>
    %23 = arith.maximumf %21, %22 : vector<8x128xf32>
    %c0_18 = arith.constant 0 : index
    %c0_19 = arith.constant 0 : index
    %24 = vector.load %arg8[%c0_18, %c0_19] : memref<8x128xf32, #tpu.memory_space<vmem>>, vector<8x128xf32>
    tpu.vector_store %arg8[%c0_18, %c0_19], %23 {strides = array<i32>} : memref<8x128xf32, #tpu.memory_space<vmem>>, vector<8x128xf32>,
    return
  }
  func.func @transform_0(%arg0: i32) -> (i32, i32) {
    %c0_i32 = arith.constant 0 : i32
    %c0_i32_0 = arith.constant 0 : i32
    return %arg0, %c0_i32 : i32, i32
  }
  func.func @transform_1(%arg0: i32) -> (i32, i32) {
    %c0_i32 = arith.constant 0 : i32
    %c0_i32_0 = arith.constant 0 : i32
    %c0_i32_1 = arith.constant 0 : i32
    return %c0_i32, %c0_i32_0 : i32, i32
  }
  func.func @transform_2(%arg0: i32) -> (i32, i32) {
    %c0_i32 = arith.constant 0 : i32
    %c0_i32_0 = arith.constant 0 : i32
    %c0_i32_1 = arith.constant 0 : i32
    return %c0_i32, %c0_i32_0 : i32, i32
  }
  func.func @transform_3(%arg0: i32) -> (i32, i32) {
    %c0_i32 = arith.constant 0 : i32
    %c0_i32_0 = arith.constant 0 : i32
    %c0_i32_1 = arith.constant 0 : i32
    return %c0_i32, %c0_i32_0 : i32, i32
  }
  func.func @transform_4(%arg0: i32) -> (i32, i32) {
    %c0_i32 = arith.constant 0 : i32
    %c0_i32_0 = arith.constant 0 : i32
    %c0_i32_1 = arith.constant 0 : i32
    return %c0_i32, %c0_i32_0 : i32, i32
  }
  func.func @transform_5(%arg0: i32) -> (i32, i32) {
    %c0_i32 = arith.constant 0 : i32
    %c0_i32_0 = arith.constant 0 : i32
    %c0_i32_1 = arith.constant 0 : i32
    return %c0_i32, %c0_i32_0 : i32, i32
  }
  func.func @transform_6(%arg0: i32) -> (i32, i32) {
    %c0_i32 = arith.constant 0 : i32
    %c0_i32_0 = arith.constant 0 : i32
    %c0_i32_1 = arith.constant 0 : i32
    return %c0_i32, %c0_i32_0 : i32, i32
  }
  func.func @transform_7(%arg0: i32) -> (i32, i32) {
    %c0_i32 = arith.constant 0 : i32
    %c0_i32_0 = arith.constant 0 : i32
    return %arg0, %c0_i32 : i32, i32
  }
}

</mosaic_0001>

<llo_original>
// kernel: chatbot_net_forward.1
$region0: #{chatbot_net_forward.1}
  #allocation0 [shape = 'u32[]', space=smem, size = 0x4, offset = 0x4, fixed_abs, tag = 'smem constant byte address 0x4 - core index']
  #allocation1 [shape = 'u32[144,128]{1,0:T(1,128)}', space=vmem, size = 0x12000, scoped, tag = 'internal scratch']
  %s0 = inlined_call_operand.vmem [shape: bf16[8,32], index: 0, kind: input, shape index: {}]
  %s1 = inlined_call_operand.vmem [shape: bf16[32,64], index: 1, kind: input, shape index: {}]
  %s2 = inlined_call_operand.vmem [shape: f32[1,64], index: 2, kind: input, shape index: {}]
  %s3 = inlined_call_operand.vmem [shape: bf16[64,64], index: 3, kind: input, shape index: {}]
  %s4 = inlined_call_operand.vmem [shape: f32[1,64], index: 4, kind: input, shape index: {}]
  %s5 = inlined_call_operand.vmem [shape: bf16[64,128], index: 5, kind: input, shape index: {}]
  %s6 = inlined_call_operand.vmem [shape: f32[1,128], index: 6, kind: input, shape index: {}]
  %s7 = inlined_call_operand.hbm [shape: f32[8,128], index: 7, kind: output, shape index: {}]
  %s8 = sld [smem:[#allocation0]]
  $region38: #{chatbot_net_forward.1} parent=0
    _
  %s10 = ssub.s32 1, %s8
  %s11 = scalar_select 0, %s10, %s8
  $region1: #{chatbot_net_forward.1} parent=0
    #allocation2 [shape = 'u8[4096]{0}', space=vmem, size = 0x1000, scoped, tag = 'output window, operand 0, single buffered']
    #allocation3 [shape = 's32[1]{0}', space=sflag, size = 0x4, scoped, tag = 'scoped memory for chatbot_net_forward.1']
    %12 = vsyncpa [#allocation3], 0
    // Predicated region
    $region2: #{chatbot_net_forward.1} parent=1 // pred_check
      _
    $region3: #{chatbot_net_forward.1} parent=1 // pred_check_branch
      %14 = sbr.rel (0) target = $region5
    $region4: #{chatbot_net_forward.1} parent=1 // pred_region
      _
    $region5: #{chatbot_net_forward.1} parent=1 // pred_fallthru
      _
    // Predicated region
    $region6: #{chatbot_net_forward.1} parent=1 // pred_check
      _
    $region7: #{chatbot_net_forward.1} parent=1 // pred_check_branch
      %16 = sbr.rel (0) target = $region9
    $region8: #{chatbot_net_forward.1} parent=1 // pred_region
      _
    $region9: #{chatbot_net_forward.1} parent=1 // pred_fallthru
      _
    // Predicated region
    $region10: #{chatbot_net_forward.1} parent=1 // pred_check
      _
    $region11: #{chatbot_net_forward.1} parent=1 // pred_check_branch
      %18 = sbr.rel (0) target = $region13
    $region12: #{chatbot_net_forward.1} parent=1 // pred_region
      _
    $region13: #{chatbot_net_forward.1} parent=1 // pred_fallthru
      _
    // Predicated region
    $region14: #{chatbot_net_forward.1} parent=1 // pred_check
      _
    $region15: #{chatbot_net_forward.1} parent=1 // pred_check_branch
      %20 = sbr.rel (0) target = $region17
    $region16: #{chatbot_net_forward.1} parent=1 // pred_region
      _
    $region17: #{chatbot_net_forward.1} parent=1 // pred_fallthru
      _
    // Predicated region
    $region18: #{chatbot_net_forward.1} parent=1 // pred_check
      _
    $region19: #{chatbot_net_forward.1} parent=1 // pred_check_branch
      %22 = sbr.rel (0) target = $region21
    $region20: #{chatbot_net_forward.1} parent=1 // pred_region
      _
    $region21: #{chatbot_net_forward.1} parent=1 // pred_fallthru
      _
    // Predicated region
    $region22: #{chatbot_net_forward.1} parent=1 // pred_check
      _
    $region23: #{chatbot_net_forward.1} parent=1 // pred_check_branch
      %24 = sbr.rel (0) target = $region25
    $region24: #{chatbot_net_forward.1} parent=1 // pred_region
      _
    $region25: #{chatbot_net_forward.1} parent=1 // pred_fallthru
      _
    // Predicated region
    $region26: #{chatbot_net_forward.1} parent=1 // pred_check
      _
    $region27: #{chatbot_net_forward.1} parent=1 // pred_check_branch
      %26 = sbr.rel (0) target = $region29
    $region28: #{chatbot_net_forward.1} parent=1 // pred_region
      _
    $region29: #{chatbot_net_forward.1} parent=1 // pred_fallthru
      _
    %v28 = vld [vmem:[%s2] sm:$0x1]
    %v29 = vld [vmem:[%s4] sm:$0x1]
    %v30 = vld [vmem:[%s6] sm:$0x1]
    %v31 = vld [vmem:[%s0] sm:$0xf]
    %v32 = vld [vmem:[%s1] sm:$0xf]
    %v33 = vld [vmem:[%s1 + $0x4] sm:$0xf]
    %v34 = vld [vmem:[%s1 + $0x8] sm:$0xf]
    %v35 = vld [vmem:[%s1 + $0xc] sm:$0xf]
    %v37 = vlaneseq
    %v38 = vshrl.u32 %v37, 7
    %v39 = vsub.s32 0, %v38
    %v40 = vrot.slane %v28, %v39
    %v46 = vunpack.c.l.b16 %v32
    %v47 = vunpack.c.l.b16 %v33
    %v48 = vunpack.c.l.b16 %v34
    %v49 = vunpack.c.l.b16 %v35
    %v50 = vpack.c.b16 %v47, %v46
    %v51 = vpack.c.b16 %v49, %v48
    %vm54 = vcmask 261120
    %v56 = vsel %vm54, %v31, 0
    %58 = vmatprep.subr.bf16.mxu0 0
    %59 = vmatpush1.bf16.msra.mxu0 0
    %60 = vmatprep.subr.bf16.mxu0 0
    %61 = vmatpush1.bf16.msra.mxu0 0
    %62 = vmatprep.subr.bf16.mxu0 0
    %63 = vmatpush1.bf16.msra.mxu0 0
    %64 = vmatprep.subr.bf16.mxu0 0
    %65 = vmatpush1.bf16.msra.mxu0 0
    %66 = vmatprep.subr.bf16.mxu0 0
    %67 = vmatpush1.bf16.msra.mxu0 0
    %68 = vmatprep.subr.bf16.mxu0 0
    %69 = vmatpush1.bf16.msra.mxu0 0
    %70 = vmatprep.subr.bf16.mxu0 0
    %71 = vmatpush1.bf16.msra.mxu0 %v51
    %72 = vmatprep.subr.bf16.mxu0 0
    %73 = vmatpush1.bf16.msra.mxu0 %v50
    %74 = vmatprep.subr.bf16.mxu0 0
    %75 = vmatpush2.bf16.msra.mxu0 0
    %76 = vmatprep.subr.bf16.mxu0 0
    %77 = vmatpush2.bf16.msra.mxu0 0
    %78 = vmatprep.subr.bf16.mxu0 0
    %79 = vmatpush2.bf16.msra.mxu0 0
    %80 = vmatprep.subr.bf16.mxu0 0
    %81 = vmatpush2.bf16.msra.mxu0 0
    %82 = vmatprep.subr.bf16.mxu0 0
    %83 = vmatpush2.bf16.msra.mxu0 0
    %84 = vmatprep.subr.bf16.mxu0 0
    %85 = vmatpush2.bf16.msra.mxu0 0
    %86 = vmatprep.subr.bf16.mxu0 0
    %87 = vmatpush2.bf16.msra.mxu0 0
    %88 = vmatprep.subr.bf16.mxu0 0
    %89 = vmatpush2.bf16.msra.mxu0 0
    %90 = vmatprep.mubr.bf16.mxu0 0
    %91 = vmatmul.mubr.bf16.gmra.mxu0 %v56
    %v92 = vpop.f32.mrf.mxu0
    %v93 = vadd.f32 %v40, %v92
    %v94 = vpop.f32.mrf.mxu0
    %v95 = vpop.f32.mrf.mxu0
    %v96 = vpop.f32.mrf.mxu0
    %97 = vdwg.mxu0
    %v98 = vmax.f32 %v93, 0.0
    %v99 = vpack.c.bf16 %v98, %v98
    %v100 = vld [vmem:[%s3] sm:$0xf]
    %v101 = vld [vmem:[%s3 + $0x4] sm:$0xf]
    %v102 = vld [vmem:[%s3 + $0x8] sm:$0xf]
    %v103 = vld [vmem:[%s3 + $0xc] sm:$0xf]
    %v104 = vld [vmem:[%s3 + $0x10] sm:$0xf]
    %v105 = vld [vmem:[%s3 + $0x14] sm:$0xf]
    %v106 = vld [vmem:[%s3 + $0x18] sm:$0xf]
    %v107 = vld [vmem:[%s3 + $0x1c] sm:$0xf]
    %v109 = vlaneseq
    %v110 = vshrl.u32 %v109, 7
    %v111 = vsub.s32 0, %v110
    %v112 = vrot.slane %v29, %v111
    %v122 = vunpack.c.l.b16 %v100
    %v123 = vunpack.c.l.b16 %v101
    %v124 = vunpack.c.l.b16 %v102
    %v125 = vunpack.c.l.b16 %v103
    %v126 = vunpack.c.l.b16 %v104
    %v127 = vunpack.c.l.b16 %v105
    %v128 = vunpack.c.l.b16 %v106
    %v129 = vunpack.c.l.b16 %v107
    %v130 = vpack.c.b16 %v123, %v122
    %v131 = vpack.c.b16 %v125, %v124
    %v132 = vpack.c.b16 %v127, %v126
    %v133 = vpack.c.b16 %v129, %v128
    %vm138 = vcmask 523264
    %v140 = vsel %vm138, %v99, 0
    %142 = vmatprep.subr.bf16.mxu0 0
    %143 = vmatpush1.bf16.msra.mxu0 0
    %144 = vmatprep.subr.bf16.mxu0 0
    %145 = vmatpush1.bf16.msra.mxu0 0
    %146 = vmatprep.subr.bf16.mxu0 0
    %147 = vmatpush1.bf16.msra.mxu0 0
    %148 = vmatprep.subr.bf16.mxu0 0
    %149 = vmatpush1.bf16.msra.mxu0 0
    %150 = vmatprep.subr.bf16.mxu0 0
    %151 = vmatpush1.bf16.msra.mxu0 %v133
    %152 = vmatprep.subr.bf16.mxu0 0
    %153 = vmatpush1.bf16.msra.mxu0 %v132
    %154 = vmatprep.subr.bf16.mxu0 0
    %155 = vmatpush1.bf16.msra.mxu0 %v131
    %156 = vmatprep.subr.bf16.mxu0 0
    %157 = vmatpush1.bf16.msra.mxu0 %v130
    %158 = vmatprep.subr.bf16.mxu0 0
    %159 = vmatpush2.bf16.msra.mxu0 0
    %160 = vmatprep.subr.bf16.mxu0 0
    %161 = vmatpush2.bf16.msra.mxu0 0
    %162 = vmatprep.subr.bf16.mxu0 0
    %163 = vmatpush2.bf16.msra.mxu0 0
    %164 = vmatprep.subr.bf16.mxu0 0
    %165 = vmatpush2.bf16.msra.mxu0 0
    %166 = vmatprep.subr.bf16.mxu0 0
    %167 = vmatpush2.bf16.msra.mxu0 0
    %168 = vmatprep.subr.bf16.mxu0 0
    %169 = vmatpush2.bf16.msra.mxu0 0
    %170 = vmatprep.subr.bf16.mxu0 0
    %171 = vmatpush2.bf16.msra.mxu0 0
    %172 = vmatprep.subr.bf16.mxu0 0
    %173 = vmatpush2.bf16.msra.mxu0 0
    %174 = vmatprep.mubr.bf16.mxu0 0
    %175 = vmatmul.mubr.bf16.gmra.mxu0 %v140
    %v176 = vpop.f32.mrf.mxu0
    %v177 = vadd.f32 %v112, %v176
    %v178 = vpop.f32.mrf.mxu0
    %v179 = vpop.f32.mrf.mxu0
    %v180 = vpop.f32.mrf.mxu0
    %181 = vdwg.mxu0
    %v182 = vmax.f32 %v177, 0.0
    %v183 = vpack.c.bf16 %v182, %v182
    %v184 = vld [vmem:[%s5] sm:$0xf]
    %v185 = vld [vmem:[%s5 + $0x4] sm:$0xf]
    %v186 = vld [vmem:[%s5 + $0x8] sm:$0xf]
    %v187 = vld [vmem:[%s5 + $0xc] sm:$0xf]
    %v188 = vld [vmem:[%s5 + $0x10] sm:$0xf]
    %v189 = vld [vmem:[%s5 + $0x14] sm:$0xf]
    %v190 = vld [vmem:[%s5 + $0x18] sm:$0xf]
    %v191 = vld [vmem:[%s5 + $0x1c] sm:$0xf]
    %v193 = vlaneseq
    %v194 = vshrl.u32 %v193, 7
    %v195 = vsub.s32 0, %v194
    %v196 = vrot.slane %v30, %v195
    %v206 = vunpack.c.l.b16 %v184
    %v207 = vunpack.c.l.b16 %v185
    %v208 = vunpack.c.l.b16 %v186
    %v209 = vunpack.c.l.b16 %v187
    %v210 = vunpack.c.l.b16 %v188
    %v211 = vunpack.c.l.b16 %v189
    %v212 = vunpack.c.l.b16 %v190
    %v213 = vunpack.c.l.b16 %v191
    %v214 = vpack.c.b16 %v207, %v206
    %v215 = vpack.c.b16 %v209, %v208
    %v216 = vpack.c.b16 %v211, %v210
    %v217 = vpack.c.b16 %v213, %v212
    %v223 = vsel %vm138, %v183, 0
    %225 = vmatprep.subr.bf16.mxu0 0
    %226 = vmatpush1.bf16.msra.mxu0 0
    %227 = vmatprep.subr.bf16.mxu0 0
    %228 = vmatpush1.bf16.msra.mxu0 0
    %229 = vmatprep.subr.bf16.mxu0 0
    %230 = vmatpush1.bf16.msra.mxu0 0
    %231 = vmatprep.subr.bf16.mxu0 0
    %232 = vmatpush1.bf16.msra.mxu0 0
    %233 = vmatprep.subr.bf16.mxu0 0
    %234 = vmatpush1.bf16.msra.mxu0 %v217
    %235 = vmatprep.subr.bf16.mxu0 0
    %236 = vmatpush1.bf16.msra.mxu0 %v216
    %237 = vmatprep.subr.bf16.mxu0 0
    %238 = vmatpush1.bf16.msra.mxu0 %v215
    %239 = vmatprep.subr.bf16.mxu0 0
    %240 = vmatpush1.bf16.msra.mxu0 %v214
    %241 = vmatprep.subr.bf16.mxu0 0
    %242 = vmatpush2.bf16.msra.mxu0 0
    %243 = vmatprep.subr.bf16.mxu0 0
    %244 = vmatpush2.bf16.msra.mxu0 0
    %245 = vmatprep.subr.bf16.mxu0 0
    %246 = vmatpush2.bf16.msra.mxu0 0
    %247 = vmatprep.subr.bf16.mxu0 0
    %248 = vmatpush2.bf16.msra.mxu0 0
    %249 = vmatprep.subr.bf16.mxu0 0
    %250 = vmatpush2.bf16.msra.mxu0 0
    %251 = vmatprep.subr.bf16.mxu0 0
    %252 = vmatpush2.bf16.msra.mxu0 0
    %253 = vmatprep.subr.bf16.mxu0 0
    %254 = vmatpush2.bf16.msra.mxu0 0
    %255 = vmatprep.subr.bf16.mxu0 0
    %256 = vmatpush2.bf16.msra.mxu0 0
    %257 = vmatprep.mubr.bf16.mxu0 0
    %258 = vmatmul.mubr.bf16.gmra.mxu0 %v223
    %v259 = vpop.f32.mrf.mxu0
    %v260 = vadd.f32 %v196, %v259
    %v261 = vpop.f32.mrf.mxu0
    %v262 = vpop.f32.mrf.mxu0
    %v263 = vpop.f32.mrf.mxu0
    %264 = vdwg.mxu0
    %v265 = vmax.f32 %v260, 0.0
    %266 = vst [vmem:[#allocation2] sm:$0xff] %v265
    // Predicated region
    $region30: #{chatbot_net_forward.1} parent=1 // pred_check
      _
    $region31: #{chatbot_net_forward.1} parent=1 // pred_check_branch
      %268 = sbr.rel (0) target = $region33
    $region32: #{chatbot_net_forward.1} parent=1 // pred_region
      %s270 = ssub.s32 128, 128
      %271 = vsyncadd [#allocation3], %s270
      %s273 = sshll.u32 [#allocation2], 4
      %s274 = int_to_ptr.vmem [resolvable:$true] %s273
      %276 = dma.vmem_to_hbm [thread:$0]  %s274, 128, %s7, [#allocation3]
    $region33: #{chatbot_net_forward.1} parent=1 // pred_fallthru
      _
    // Predicated region
    $region34: #{chatbot_net_forward.1} parent=1 // pred_check
      _
    $region35: #{chatbot_net_forward.1} parent=1 // pred_check_branch
      %278 = sbr.rel (0) target = $region37
    $region36: #{chatbot_net_forward.1} parent=1 // pred_region
      %279 = dma.done [#allocation3], 128
    $region37: #{chatbot_net_forward.1} parent=1 // pred_fallthru
      _
    %280 = vsyncpa [#allocation3], 1

</llo_original>
